<compile_context>
chip_gen: v7x
topology: tpu7x:2x2x1
jax: 0.10.0
libtpu: 0.0.40
codegen_flags: <defaults>
</compile_context>

<pallas_src>
import functools

import jax
import jax.numpy as jnp
from jax import lax
from jax.experimental import pallas as pl
from jax.experimental.pallas import tpu as pltpu


def _silu(v):
    return v * jax.nn.sigmoid(v)


def _gram_recurrence_coeffs(beta_weights, degree):
    # coef[i] = beta(i-1, i) from the PyTorch module:
    #   p_i = x * p_{i-1} - coef[i] * p_{i-2}
    coef = jnp.zeros((degree + 1,), jnp.float32)
    for i in range(2, degree + 1):
        n, m = float(i - 1), float(i)
        c = (m + n) * (m - n) * n ** 2 * (4.0 * n ** 2 - 1.0) / (m ** 2)
        coef = coef.at[i].set(c * beta_weights[i - 1])
    return coef


def _make_kag_kernel(Cig, inner, degree, k, Wp, Np, Npe, N):
    f32 = jnp.float32
    bf16 = jnp.bfloat16
    # flat-index shift of conv tap (kh, kw) in the padded (Hp, Wp) layout
    shifts = [kh * Wp + kw for kh in range(k) for kw in range(k)]

    def kernel(coef_ref, masks_ref, x_ref, wc_ref, iw_ref, o_ref):
        x = x_ref[...]                               # (Cig, Npe) f32, zero at pads/tail
        in_mask = masks_ref[0:1, :]                  # (1, Npe) valid input positions
        out_mask = masks_ref[1:2, 0:Np]              # (1, Np)  valid output positions

        # ---- feature slab: channels on sublanes, flat spatial on lanes -----
        # base rows: SiLU(x); SiLU(0)=0 so the zero padding stays zero.
        feats = [_silu(x).astype(bf16)]

        # bottleneck 1x1 projection (exact f32 VPU FMAs; tiny contraction)
        iw = iw_ref[...]                             # (inner, Cig) f32
        if Cig <= 16:
            acc = jnp.zeros((inner, Npe), f32)
            for ci in range(Cig):
                acc = acc + iw[:, ci:ci + 1] * x[ci:ci + 1, :]
        else:
            acc = jnp.dot(iw, x, preferred_element_type=f32)
        t = jnp.tanh(acc)                            # (inner, Npe)

        # Gram polynomial recurrence; SiLU'd rows masked to zero at pad/tail
        # positions so the fused conv sees the same zero padding as reference.
        p0 = jnp.ones_like(t)
        p1 = t
        feats.append((_silu(p0) * in_mask).astype(bf16))
        feats.append((_silu(p1) * in_mask).astype(bf16))
        for d in range(2, degree + 1):
            p2 = t * p1 - coef_ref[d] * p0
            feats.append((_silu(p2) * in_mask).astype(bf16))
            p0, p1 = p1, p2
        F = jnp.concatenate(feats, axis=0)           # (CF, Npe) bf16

        # ---- im2col via static lane-offset slices, taps stacked on sublanes
        patch = jnp.concatenate([F[:, s:s + Np] for s in shifts], axis=0)

        # ---- one fused deep-K matmul: base conv + degree-fused poly conv
        #      (out-projection already folded into the weights) --------------
        z = jnp.dot(wc_ref[...], patch, preferred_element_type=f32)   # (Cog, Np)

        # ---- InstanceNorm over valid output positions (two-pass) + SiLU ----
        inv_n = 1.0 / N
        mean = jnp.sum(z * out_mask, axis=-1, keepdims=True) * inv_n
        cen = (z - mean) * out_mask
        var = jnp.sum(cen * cen, axis=-1, keepdims=True) * inv_n
        zn = (z - mean) * lax.rsqrt(var + 1e-5)
        o_ref[...] = _silu(zn).astype(o_ref.dtype)

    return kernel


def bottleneck_kagn_conv2d(x, params, *, degree, kernel_size, padding, groups):
    """x: (B, Cin, H, W) float32 NCHW -> (B, Cout, Ho, Wo) float32 NCHW.

    Only stride=1, dilation=1 supported.
    """
    B, Cin, H, W = x.shape
    base_w = params["base_w"]        # (G, Cog, Cig, k, k)
    inner_w = params["inner_w"]      # (G, inner, Cig, 1, 1)
    out_w = params["out_w"]          # (G, Cog, inner, 1, 1)
    poly_w = params["poly_w"]        # (G, inner, inner*(deg+1), k, k)
    beta_w = params["beta_w"]        # (deg+1,)

    G = groups
    Cig = Cin // G
    Cog = base_w.shape[1]
    inner = inner_w.shape[1]
    nbasis = inner * (degree + 1)
    k = kernel_size
    pad = padding
    Hp, Wp = H + 2 * pad, W + 2 * pad
    Ho, Wo = Hp - (k - 1), Wp - (k - 1)
    Np = Hp * Wp
    S = (k - 1) * Wp + (k - 1)       # largest tap shift
    Npe = Np + S                     # zero tail so every tap slice is Np wide
    CF = Cig + nbasis
    N = Ho * Wo
    assert degree >= 1

    coef = _gram_recurrence_coeffs(beta_w, degree)

    # ---- grouped, channels-first, zero-padded, flattened-spatial input -----
    xg = x.reshape(B, G, Cig, H, W).transpose(1, 0, 2, 3, 4)          # (G,B,Cig,H,W)
    xg = jnp.pad(xg, ((0, 0), (0, 0), (0, 0), (pad, pad), (pad, pad)))
    xg = xg.reshape(G, B, Cig, Np)
    xg = jnp.pad(xg, ((0, 0), (0, 0), (0, 0), (0, S)))                # (G,B,Cig,Npe)

    # ---- fold the 1x1 out-projection into the poly conv weights and fuse
    #      with the base conv into one (Cog, k*k*CF) matrix -------------------
    ow2 = out_w[:, :, :, 0, 0]                                        # (G,Cog,inner)
    pw_fold = jnp.einsum('goj,gjmhw->gomhw', ow2, poly_w,
                         precision=lax.Precision.HIGHEST)             # (G,Cog,nbasis,k,k)
    wc = jnp.concatenate([base_w, pw_fold], axis=2)                   # (G,Cog,CF,k,k)
    # column index = (kh*k + kw)*CF + c  — matches the patch row ordering
    wc = wc.transpose(0, 1, 3, 4, 2).reshape(G, Cog, k * k * CF)
    wc = wc.astype(jnp.bfloat16)

    iw = inner_w[:, :, :, 0, 0]                                       # (G,inner,Cig)

    # ---- valid-position masks in the flat padded layout ---------------------
    r = jnp.arange(Hp)[:, None]
    c = jnp.arange(Wp)[None, :]
    in_mask = (r >= pad) & (r < pad + H) & (c >= pad) & (c < pad + W)
    out_mask = (r < Ho) & (c < Wo)
    masks = jnp.stack([in_mask.reshape(Np),
                       out_mask.reshape(Np)]).astype(jnp.float32)
    masks = jnp.pad(masks, ((0, 0), (0, S)))                          # (2, Npe)

    kernel = _make_kag_kernel(Cig, inner, degree, k, Wp, Np, Npe, N)

    out = pl.pallas_call(
        kernel,
        out_shape=jax.ShapeDtypeStruct((G, B, Cog, Np), jnp.float32),
        grid_spec=pltpu.PrefetchScalarGridSpec(
            num_scalar_prefetch=0,
            grid=(G, B),
            in_specs=[
                pl.BlockSpec(memory_space=pltpu.MemorySpace.SMEM),            # coef
                pl.BlockSpec((2, Npe), lambda g, b: (0, 0)),                  # masks
                pl.BlockSpec((None, None, Cig, Npe),
                             lambda g, b: (g, b, 0, 0)),                      # x
                pl.BlockSpec((None, Cog, k * k * CF),
                             lambda g, b: (g, 0, 0)),                         # fused w
                pl.BlockSpec((None, inner, Cig), lambda g, b: (g, 0, 0)),     # inner w
            ],
            out_specs=pl.BlockSpec((None, None, Cog, Np),
                                   lambda g, b: (g, b, 0, 0)),
        ),
        compiler_params=pltpu.CompilerParams(
            dimension_semantics=("parallel", "parallel"),
            vmem_limit_bytes=32 * 1024 * 1024),
    )(coef, masks, xg, wc, iw)

    # crop the padded flat layout back to the valid (Ho, Wo) window
    out = out.reshape(G, B, Cog, Hp, Wp)[:, :, :, :Ho, :Wo]
    out = out.transpose(1, 0, 2, 3, 4).reshape(B, G * Cog, Ho, Wo)
    return out


def bottleneck_kagn_conv2d_reference(x, params, *, degree, kernel_size,
                                     padding, groups):
    """Pure-JAX reference (mirrors the PyTorch forward), for validation."""
    B, Cin, H, W = x.shape
    G = groups
    Cig = Cin // G
    coef = _gram_recurrence_coeffs(params["beta_w"], degree)
    prec = lax.Precision.HIGHEST
    dn = ("NCHW", "OIHW", "NCHW")

    def conv(inp, w, p):
        return lax.conv_general_dilated(inp, w, window_strides=(1, 1),
                                        padding=[(p, p), (p, p)],
                                        dimension_numbers=dn, precision=prec)

    outs = []
    for g in range(G):
        xg = x[:, g * Cig:(g + 1) * Cig]
        basis = conv(_silu(xg), params["base_w"][g], padding)
        t = jnp.tanh(conv(xg, params["inner_w"][g], 0))
        p0 = jnp.ones_like(t)
        p1 = t
        grams = [p0, p1]
        for d in range(2, degree + 1):
            p2 = t * p1 - coef[d] * p0
            grams.append(p2)
            p0, p1 = p1, p2
        gb = _silu(jnp.concatenate(grams, axis=1))
        y = conv(gb, params["poly_w"][g], padding)
        y = conv(y, params["out_w"][g], 0)
        z = y + basis
        mean = jnp.mean(z, axis=(2, 3), keepdims=True)
        var = jnp.mean((z - mean) ** 2, axis=(2, 3), keepdims=True)
        outs.append(_silu((z - mean) * lax.rsqrt(var + 1e-5)))
    return jnp.concatenate(outs, axis=1)


if __name__ == "__main__":
    # Module config (ndim=2).
    B, input_dim, output_dim = 2, 4, 8
    H = W = 16
    degree, kernel_size, padding, groups = 3, 3, 1, 1
    dim_reduction, min_internal = 4.0, 16

    Cig = input_dim // groups
    Cog = output_dim // groups
    inner = int(max(Cig / dim_reduction, Cog / dim_reduction))
    if inner < min_internal:
        inner = min(min_internal, Cig, Cog)
    nbasis = inner * (degree + 1)

    key = jax.random.PRNGKey(0)
    ks = jax.random.split(key, 6)

    def kaiming_uniform(k_, shape, fan_in):
        bound = (3.0 ** 0.5) / (fan_in ** 0.5)
        return jax.random.uniform(k_, shape, jnp.float32, -bound, bound)

    params = {
        "base_w": kaiming_uniform(
            ks[0], (groups, Cog, Cig, kernel_size, kernel_size),
            Cig * kernel_size * kernel_size),
        "inner_w": kaiming_uniform(ks[1], (groups, inner, Cig, 1, 1), Cig),
        "out_w": kaiming_uniform(ks[2], (groups, Cog, inner, 1, 1), inner),
        "poly_w": kaiming_uniform(
            ks[3], (groups, inner, nbasis, kernel_size, kernel_size),
            nbasis * kernel_size * kernel_size),
        "beta_w": jax.random.normal(ks[4], (degree + 1,), jnp.float32)
                  * (1.0 / (kernel_size ** 2 * input_dim * (degree + 1.0))),
    }

    x = jax.random.normal(ks[5], (B, input_dim, H, W), jnp.float32)

    fwd = jax.jit(functools.partial(
        bottleneck_kagn_conv2d, degree=degree, kernel_size=kernel_size,
        padding=padding, groups=groups))
    out = jax.block_until_ready(fwd(x, params))

    ref = bottleneck_kagn_conv2d_reference(
        x, params, degree=degree, kernel_size=kernel_size, padding=padding,
        groups=groups)

    assert out.shape == (B, output_dim, H, W), out.shape
    err = float(jnp.max(jnp.abs(out - ref)))
    # Kernel runs the fused conv with bf16 operands / f32 accumulation and the
    # out-projection folded into the weights; tolerance widened vs the
    # f32-HIGHEST reference accordingly.
    assert err < 5e-2, f"max abs err {err}"
    print("KERNEL_OK")
</pallas_src>

<mosaic_0001>
module attributes {stable_mosaic.version = 11 : i64} {
  func.func @kernel(%arg0: i32, %arg1: i32, %arg2: memref<4xf32, #tpu.memory_space<smem>>, %arg3: memref<2x362xf32, #tpu.memory_space<vmem>>, %arg4: memref<1x1x4x362xf32, #tpu.memory_space<vmem>>, %arg5: memref<1x8x180xbf16, #tpu.memory_space<vmem>>, %arg6: memref<1x4x4xf32, #tpu.memory_space<vmem>>, %arg7: memref<1x1x8x324xf32, #tpu.memory_space<vmem>>) attributes {dimension_semantics = [#tpu.dimension_semantics<parallel>, #tpu.dimension_semantics<parallel>], iteration_bounds = array<i64: 1, 2>, scalar_prefetch = 0 : i64, scratch_operands = 0 : i64, tpu.core_type = #tpu.core_type<tc>, window_params = [{transform_indices = @transform_0, window_bounds = array<i64: 4>}, {pipeline_mode = #tpu.pipeline_mode<synchronous>, transform_indices = @transform_1, window_bounds = array<i64: 2, 362>}, {transform_indices = @transform_2, window_bounds = array<i64: 1, 1, 4, 362>}, {transform_indices = @transform_3, window_bounds = array<i64: 1, 8, 180>}, {transform_indices = @transform_4, window_bounds = array<i64: 1, 4, 4>}, {transform_indices = @transform_5, window_bounds = array<i64: 1, 1, 8, 324>}]} {
    %c0 = arith.constant 0 : index
    %c0_0 = arith.constant 0 : index
    %c0_1 = arith.constant 0 : index
    %c0_2 = arith.constant 0 : index
    %0 = vector.load %arg4[%c0, %c0_0, %c0_1, %c0_2] : memref<1x1x4x362xf32, #tpu.memory_space<vmem>>, vector<1x1x4x362xf32>
    %1 = vector.shape_cast %0 : vector<1x1x4x362xf32> to vector<4x362xf32>
    %c0_3 = arith.constant 0 : index
    %c0_4 = arith.constant 0 : index
    %2 = vector.load %arg3[%c0_3, %c0_4] : memref<2x362xf32, #tpu.memory_space<vmem>>, vector<1x362xf32>
    %c1 = arith.constant 1 : index
    %c0_5 = arith.constant 0 : index
    %3 = vector.load %arg3[%c1, %c0_5] : memref<2x362xf32, #tpu.memory_space<vmem>>, vector<1x324xf32>
    %4 = arith.negf %1 : vector<4x362xf32>
    %5 = math.exp %4 : vector<4x362xf32>
    %cst = arith.constant 1.000000e+00 : f32
    %6 = vector.broadcast %cst : f32 to vector<4x362xf32>
    %7 = arith.addf %6, %5 : vector<4x362xf32>
    %8 = arith.divf %6, %7 : vector<4x362xf32>
    %9 = arith.mulf %1, %8 : vector<4x362xf32>
    %10 = arith.truncf %9 : vector<4x362xf32> to vector<4x362xbf16>
    %c0_6 = arith.constant 0 : index
    %c0_7 = arith.constant 0 : index
    %c0_8 = arith.constant 0 : index
    %11 = vector.load %arg6[%c0_6, %c0_7, %c0_8] : memref<1x4x4xf32, #tpu.memory_space<vmem>>, vector<1x4x4xf32>
    %12 = vector.shape_cast %11 : vector<1x4x4xf32> to vector<4x4xf32>
    %cst_9 = arith.constant 0.000000e+00 : f32
    %13 = vector.broadcast %cst_9 : f32 to vector<4x362xf32>
    %14 = vector.extract_strided_slice %12 {offsets = [0, 0], sizes = [4, 1], strides = [1, 1]} : vector<4x4xf32> to vector<4x1xf32>
    %15 = vector.extract_strided_slice %1 {offsets = [0, 0], sizes = [1, 362], strides = [1, 1]} : vector<4x362xf32> to vector<1x362xf32>
    %16 = vector.broadcast %14 : vector<4x1xf32> to vector<4x362xf32>
    %17 = vector.broadcast %15 : vector<1x362xf32> to vector<4x362xf32>
    %18 = arith.mulf %16, %17 : vector<4x362xf32>
    %19 = arith.addf %13, %18 : vector<4x362xf32>
    %20 = vector.extract_strided_slice %12 {offsets = [0, 1], sizes = [4, 1], strides = [1, 1]} : vector<4x4xf32> to vector<4x1xf32>
    %21 = vector.extract_strided_slice %1 {offsets = [1, 0], sizes = [1, 362], strides = [1, 1]} : vector<4x362xf32> to vector<1x362xf32>
    %22 = vector.broadcast %20 : vector<4x1xf32> to vector<4x362xf32>
    %23 = vector.broadcast %21 : vector<1x362xf32> to vector<4x362xf32>
    %24 = arith.mulf %22, %23 : vector<4x362xf32>
    %25 = arith.addf %19, %24 : vector<4x362xf32>
    %26 = vector.extract_strided_slice %12 {offsets = [0, 2], sizes = [4, 1], strides = [1, 1]} : vector<4x4xf32> to vector<4x1xf32>
    %27 = vector.extract_strided_slice %1 {offsets = [2, 0], sizes = [1, 362], strides = [1, 1]} : vector<4x362xf32> to vector<1x362xf32>
    %28 = vector.broadcast %26 : vector<4x1xf32> to vector<4x362xf32>
    %29 = vector.broadcast %27 : vector<1x362xf32> to vector<4x362xf32>
    %30 = arith.mulf %28, %29 : vector<4x362xf32>
    %31 = arith.addf %25, %30 : vector<4x362xf32>
    %32 = vector.extract_strided_slice %12 {offsets = [0, 3], sizes = [4, 1], strides = [1, 1]} : vector<4x4xf32> to vector<4x1xf32>
    %33 = vector.extract_strided_slice %1 {offsets = [3, 0], sizes = [1, 362], strides = [1, 1]} : vector<4x362xf32> to vector<1x362xf32>
    %34 = vector.broadcast %32 : vector<4x1xf32> to vector<4x362xf32>
    %35 = vector.broadcast %33 : vector<1x362xf32> to vector<4x362xf32>
    %36 = arith.mulf %34, %35 : vector<4x362xf32>
    %37 = arith.addf %31, %36 : vector<4x362xf32>
    %38 = math.tanh %37 : vector<4x362xf32>
    %cst_10 = arith.constant 1.000000e+00 : f32
    %39 = vector.broadcast %cst_10 : f32 to vector<4x362xf32>
    %40 = arith.negf %39 : vector<4x362xf32>
    %41 = math.exp %40 : vector<4x362xf32>
    %cst_11 = arith.constant 1.000000e+00 : f32
    %42 = vector.broadcast %cst_11 : f32 to vector<4x362xf32>
    %43 = arith.addf %42, %41 : vector<4x362xf32>
    %44 = arith.divf %42, %43 : vector<4x362xf32>
    %45 = arith.mulf %39, %44 : vector<4x362xf32>
    %46 = vector.broadcast %2 : vector<1x362xf32> to vector<4x362xf32>
    %47 = arith.mulf %45, %46 : vector<4x362xf32>
    %48 = arith.truncf %47 : vector<4x362xf32> to vector<4x362xbf16>
    %49 = arith.negf %38 : vector<4x362xf32>
    %50 = math.exp %49 : vector<4x362xf32>
    %cst_12 = arith.constant 1.000000e+00 : f32
    %51 = vector.broadcast %cst_12 : f32 to vector<4x362xf32>
    %52 = arith.addf %51, %50 : vector<4x362xf32>
    %53 = arith.divf %51, %52 : vector<4x362xf32>
    %54 = arith.mulf %38, %53 : vector<4x362xf32>
    %55 = vector.broadcast %2 : vector<1x362xf32> to vector<4x362xf32>
    %56 = arith.mulf %54, %55 : vector<4x362xf32>
    %57 = arith.truncf %56 : vector<4x362xf32> to vector<4x362xbf16>
    %58 = arith.mulf %38, %38 : vector<4x362xf32>
    %c2 = arith.constant 2 : index
    %59 = memref.load %arg2[%c2] : memref<4xf32, #tpu.memory_space<smem>>
    %60 = vector.broadcast %59 : f32 to vector<4x362xf32>
    %61 = arith.mulf %60, %39 : vector<4x362xf32>
    %62 = arith.subf %58, %61 : vector<4x362xf32>
    %63 = arith.negf %62 : vector<4x362xf32>
    %64 = math.exp %63 : vector<4x362xf32>
    %cst_13 = arith.constant 1.000000e+00 : f32
    %65 = vector.broadcast %cst_13 : f32 to vector<4x362xf32>
    %66 = arith.addf %65, %64 : vector<4x362xf32>
    %67 = arith.divf %65, %66 : vector<4x362xf32>
    %68 = arith.mulf %62, %67 : vector<4x362xf32>
    %69 = vector.broadcast %2 : vector<1x362xf32> to vector<4x362xf32>
    %70 = arith.mulf %68, %69 : vector<4x362xf32>
    %71 = arith.truncf %70 : vector<4x362xf32> to vector<4x362xbf16>
    %72 = arith.mulf %38, %62 : vector<4x362xf32>
    %c3 = arith.constant 3 : index
    %73 = memref.load %arg2[%c3] : memref<4xf32, #tpu.memory_space<smem>>
    %74 = vector.broadcast %73 : f32 to vector<4x362xf32>
    %75 = arith.mulf %74, %38 : vector<4x362xf32>
    %76 = arith.subf %72, %75 : vector<4x362xf32>
    %77 = arith.negf %76 : vector<4x362xf32>
    %78 = math.exp %77 : vector<4x362xf32>
    %cst_14 = arith.constant 1.000000e+00 : f32
    %79 = vector.broadcast %cst_14 : f32 to vector<4x362xf32>
    %80 = arith.addf %79, %78 : vector<4x362xf32>
    %81 = arith.divf %79, %80 : vector<4x362xf32>
    %82 = arith.mulf %76, %81 : vector<4x362xf32>
    %83 = vector.broadcast %2 : vector<1x362xf32> to vector<4x362xf32>
    %84 = arith.mulf %82, %83 : vector<4x362xf32>
    %85 = arith.truncf %84 : vector<4x362xf32> to vector<4x362xbf16>
    %86 = tpu.concatenate %10, %48, %57, %71, %85 in 0 : vector<4x362xbf16>, vector<4x362xbf16>, vector<4x362xbf16>, vector<4x362xbf16>, vector<4x362xbf16> -> vector<20x362xbf16>
    %87 = vector.extract_strided_slice %86 {offsets = [0, 0], sizes = [20, 324], strides = [1, 1]} : vector<20x362xbf16> to vector<20x324xbf16>
    %88 = vector.extract_strided_slice %86 {offsets = [0, 1], sizes = [20, 324], strides = [1, 1]} : vector<20x362xbf16> to vector<20x324xbf16>
    %89 = vector.extract_strided_slice %86 {offsets = [0, 2], sizes = [20, 324], strides = [1, 1]} : vector<20x362xbf16> to vector<20x324xbf16>
    %90 = vector.extract_strided_slice %86 {offsets = [0, 18], sizes = [20, 324], strides = [1, 1]} : vector<20x362xbf16> to vector<20x324xbf16>
    %91 = vector.extract_strided_slice %86 {offsets = [0, 19], sizes = [20, 324], strides = [1, 1]} : vector<20x362xbf16> to vector<20x324xbf16>
    %92 = vector.extract_strided_slice %86 {offsets = [0, 20], sizes = [20, 324], strides = [1, 1]} : vector<20x362xbf16> to vector<20x324xbf16>
    %93 = vector.extract_strided_slice %86 {offsets = [0, 36], sizes = [20, 324], strides = [1, 1]} : vector<20x362xbf16> to vector<20x324xbf16>
    %94 = vector.extract_strided_slice %86 {offsets = [0, 37], sizes = [20, 324], strides = [1, 1]} : vector<20x362xbf16> to vector<20x324xbf16>
    %95 = vector.extract_strided_slice %86 {offsets = [0, 38], sizes = [20, 324], strides = [1, 1]} : vector<20x362xbf16> to vector<20x324xbf16>
    %96 = tpu.concatenate %87, %88, %89, %90, %91, %92, %93, %94, %95 in 0 : vector<20x324xbf16>, vector<20x324xbf16>, vector<20x324xbf16>, vector<20x324xbf16>, vector<20x324xbf16>, vector<20x324xbf16>, vector<20x324xbf16>, vector<20x324xbf16>, vector<20x324xbf16> -> vector<180x324xbf16>
    %c0_15 = arith.constant 0 : index
    %c0_16 = arith.constant 0 : index
    %c0_17 = arith.constant 0 : index
    %97 = vector.load %arg5[%c0_15, %c0_16, %c0_17] : memref<1x8x180xbf16, #tpu.memory_space<vmem>>, vector<1x8x180xbf16>
    %98 = vector.shape_cast %97 : vector<1x8x180xbf16> to vector<8x180xbf16>
    %cst_18 = arith.constant dense<0.000000e+00> : vector<8x324xf32>
    %99 = tpu.matmul %98, %96, %cst_18 {dimension_numbers = #tpu.dot_dimension_numbers<[1], [0], [0], [1], [0, 0, 1, 1], [], []>} : vector<8x180xbf16>, vector<180x324xbf16>, vector<8x324xf32> -> vector<8x324xf32>
    %100 = vector.broadcast %3 : vector<1x324xf32> to vector<8x324xf32>
    %101 = arith.mulf %99, %100 : vector<8x324xf32>
    %cst_19 = arith.constant dense<0.000000e+00> : vector<8xf32>
    %102 = vector.multi_reduction <add>, %101, %cst_19 [1] : vector<8x324xf32> to vector<8xf32>
    %103 = vector.shape_cast %102 : vector<8xf32> to vector<8x1xf32>
    %cst_20 = arith.constant 3.906250e-03 : f32
    %104 = vector.broadcast %cst_20 : f32 to vector<8x1xf32>
    %105 = arith.mulf %103, %104 : vector<8x1xf32>
    %106 = vector.broadcast %105 : vector<8x1xf32> to vector<8x324xf32>
    %107 = arith.subf %99, %106 : vector<8x324xf32>
    %108 = vector.broadcast %3 : vector<1x324xf32> to vector<8x324xf32>
    %109 = arith.mulf %107, %108 : vector<8x324xf32>
    %110 = arith.mulf %109, %109 : vector<8x324xf32>
    %cst_21 = arith.constant dense<0.000000e+00> : vector<8xf32>
    %111 = vector.multi_reduction <add>, %110, %cst_21 [1] : vector<8x324xf32> to vector<8xf32>
    %112 = vector.shape_cast %111 : vector<8xf32> to vector<8x1xf32>
    %cst_22 = arith.constant 3.906250e-03 : f32
    %113 = vector.broadcast %cst_22 : f32 to vector<8x1xf32>
    %114 = arith.mulf %112, %113 : vector<8x1xf32>
    %115 = vector.broadcast %105 : vector<8x1xf32> to vector<8x324xf32>
    %116 = arith.subf %99, %115 : vector<8x324xf32>
    %cst_23 = arith.constant 9.99999974E-6 : f32
    %117 = vector.broadcast %cst_23 : f32 to vector<8x1xf32>
    %118 = arith.addf %114, %117 : vector<8x1xf32>
    %119 = math.rsqrt %118 : vector<8x1xf32>
    %120 = vector.broadcast %119 : vector<8x1xf32> to vector<8x324xf32>
    %121 = arith.mulf %116, %120 : vector<8x324xf32>
    %122 = arith.negf %121 : vector<8x324xf32>
    %123 = math.exp %122 : vector<8x324xf32>
    %cst_24 = arith.constant 1.000000e+00 : f32
    %124 = vector.broadcast %cst_24 : f32 to vector<8x324xf32>
    %125 = arith.addf %124, %123 : vector<8x324xf32>
    %126 = arith.divf %124, %125 : vector<8x324xf32>
    %127 = arith.mulf %121, %126 : vector<8x324xf32>
    %c0_25 = arith.constant 0 : index
    %c0_26 = arith.constant 0 : index
    %c0_27 = arith.constant 0 : index
    %c0_28 = arith.constant 0 : index
    %128 = vector.load %arg7[%c0_25, %c0_26, %c0_27, %c0_28] : memref<1x1x8x324xf32, #tpu.memory_space<vmem>>, vector<1x1x8x324xf32>
    %129 = vector.shape_cast %128 : vector<1x1x8x324xf32> to vector<8x324xf32>
    %130 = vector.shape_cast %127 : vector<8x324xf32> to vector<1x1x8x324xf32>
    tpu.vector_store %arg7[%c0_25, %c0_26, %c0_27, %c0_28], %130 {strides = array<i32>} : memref<1x1x8x324xf32, #tpu.memory_space<vmem>>, vector<1x1x8x324xf32>,
    return
  }
  func.func @transform_0(%arg0: i32, %arg1: i32) -> i32 {
    %c0_i32 = arith.constant 0 : i32
    %c0_i32_0 = arith.constant 0 : i32
    return %c0_i32 : i32
  }
  func.func @transform_1(%arg0: i32, %arg1: i32) -> (i32, i32) {
    %c0_i32 = arith.constant 0 : i32
    %c0_i32_0 = arith.constant 0 : i32
    %c0_i32_1 = arith.constant 0 : i32
    return %c0_i32, %c0_i32_0 : i32, i32
  }
  func.func @transform_2(%arg0: i32, %arg1: i32) -> (i32, i32, i32, i32) {
    %c0_i32 = arith.constant 0 : i32
    %c0_i32_0 = arith.constant 0 : i32
    %c0_i32_1 = arith.constant 0 : i32
    return %arg0, %arg1, %c0_i32, %c0_i32_0 : i32, i32, i32, i32
  }
  func.func @transform_3(%arg0: i32, %arg1: i32) -> (i32, i32, i32) {
    %c0_i32 = arith.constant 0 : i32
    %c0_i32_0 = arith.constant 0 : i32
    %c0_i32_1 = arith.constant 0 : i32
    return %arg0, %c0_i32, %c0_i32_0 : i32, i32, i32
  }
  func.func @transform_4(%arg0: i32, %arg1: i32) -> (i32, i32, i32) {
    %c0_i32 = arith.constant 0 : i32
    %c0_i32_0 = arith.constant 0 : i32
    %c0_i32_1 = arith.constant 0 : i32
    return %arg0, %c0_i32, %c0_i32_0 : i32, i32, i32
  }
  func.func @transform_5(%arg0: i32, %arg1: i32) -> (i32, i32, i32, i32) {
    %c0_i32 = arith.constant 0 : i32
    %c0_i32_0 = arith.constant 0 : i32
    %c0_i32_1 = arith.constant 0 : i32
    return %arg0, %arg1, %c0_i32, %c0_i32_0 : i32, i32, i32, i32
  }
}

</mosaic_0001>

<llo_original>
// kernel: bottleneck_kagn_conv2d.1
$region0: #{bottleneck_kagn_conv2d.1}
  #allocation0 [shape = 'u32[]', space=smem, size = 0x4, offset = 0x4, fixed_abs, tag = 'smem constant byte address 0x4 - core index']
  #allocation1 [shape = 'u32[144,128]{1,0:T(1,128)}', space=vmem, size = 0x12000, scoped, tag = 'internal scratch']
  %s0 = inlined_call_operand.vmem [shape: f32[4], index: 0, kind: input, shape index: {}]
  %s1 = inlined_call_operand.vmem [shape: f32[2,362], index: 1, kind: input, shape index: {}]
  %s2 = inlined_call_operand.vmem [shape: f32[1,2,4,362], index: 2, kind: input, shape index: {}]
  %s3 = inlined_call_operand.vmem [shape: bf16[1,8,180], index: 3, kind: input, shape index: {}]
  %s4 = inlined_call_operand.vmem [shape: f32[1,4,4], index: 4, kind: input, shape index: {}]
  %s5 = inlined_call_operand.vmem [shape: f32[1,2,8,324], index: 5, kind: output, shape index: {}]
  %s6 = sld [smem:[#allocation0]]
  $region57: #{bottleneck_kagn_conv2d.1} parent=0
    _
  %s8 = ssub.s32 1, %s6
  %s9 = scalar_select 0, %s8, %s6
  $region1: #{bottleneck_kagn_conv2d.1} parent=0
    #allocation2 [shape = 'u8[512]{0}', space=smem, size = 0x200, scoped, tag = 'input window, operand 0, single buffered']
    #allocation3 [shape = 's32[2]{0}', space=sflag, size = 0x8, scoped, tag = 'scoped memory for bottleneck_kagn_conv2d.1']
    %10 = vsyncpa [#allocation3], 0
    loop: start=0, step=1, limit=4
    $region2: #{bottleneck_kagn_conv2d.1} parent=1 // loop_pre_header
      _
    $region3: #{bottleneck_kagn_conv2d.1} parent=1 // loop_header
      %s12 = sphi 0, %s16
      %p13 = scmp.ge.s32.totalorder %s12, 4
      %s19 = sphi 0, %s31
      %s20 = sphi 0, %s27
      %s21 = sphi 0, %s19
      %s22 = sphi 0, %s20
      %s23 = sphi 0, %s21
      %s24 = sphi 0, %s22
      %s32 = sphi 0, %s32
      %s34 = sphi 0, %s32
      %s35 = sphi 0, %s34
      %s49 = sphi 0, %s35
      %s53 = sphi 0, %s53
      %s55 = sphi 0, %s53
      %s56 = sphi 0, %s55
      %s70 = sphi 0, %s56
      %s78 = sphi 0, %s80
      %s81 = sphi 0, %s78
      %s82 = sphi 0, %s81
      %s98 = sphi 0, %s82
      %s104 = sphi 0, %s106
      %s107 = sphi 0, %s104
      %s108 = sphi 0, %s107
      %s124 = sphi 0, %s108
      %s130 = sphi 0, %s132
      %s133 = sphi 0, %s130
      %s134 = sphi 0, %s133
      %s150 = sphi 0, %s134
      %s158 = sphi 0, %s160
      %s161 = sphi 0, %s158
      %s162 = sphi 0, %s161
      %s178 = sphi 0, %s162
    $region4: #{bottleneck_kagn_conv2d.1} parent=1 // loop_header_branch
      %15 = sbr.rel (%p13) target = $region8
    $region5: #{bottleneck_kagn_conv2d.1} parent=1 // loop_body
      %s17 = ssub.s32 %s12, 1
      %s18 = ssub.s32 %s12, 2
      %s25 = sadd.s32 1, %s20
      %p26 = scmp.ge.s32.totalorder %s25, 2
      %s27 = scalar_select %p26, 0, %s25
      %s28 = sadd.s32 1, %s19
      %s29 = scalar_select %p26, %s28, %s19
      %p30 = scmp.ge.s32.totalorder %s29, 1
      %s31 = scalar_select %p30, 0, %s29
      %s33 = sadd.s32 %s32, 1
      %p36 = scmp.eq.s32.totalorder %s12, 1
      %p37 = scmp.ne.s32.totalorder %s32, %s34
      %p38 = scmp.eq.s32.totalorder %s12, 0
      %p39 = por %p37, %p38
      %p40 = scmp.ne.s32.totalorder %s32, %s34
      %p41 = scmp.eq.s32.totalorder %s17, 1
      %p42 = por %p40, %p41
      %p43 = scmp.ne.s32.totalorder %s34, %s35
      %p44 = scmp.eq.s32.totalorder %s17, 0
      %p45 = por %p43, %p44
      %p46 = scmp.ne.s32.totalorder %s34, %s35
      %p47 = scmp.eq.s32.totalorder %s18, 1
      %p48 = por %p46, %p47
      %p50 = scmp.ne.s32.totalorder %s35, %s49
      %p51 = scmp.eq.s32.totalorder %s18, 0
      %p52 = por %p50, %p51
      %s54 = sadd.s32 %s53, 1
      %p57 = scmp.eq.s32.totalorder %s12, 1
      %p58 = scmp.ne.s32.totalorder %s53, %s55
      %p59 = scmp.eq.s32.totalorder %s12, 0
      %p60 = por %p58, %p59
      %p61 = scmp.ne.s32.totalorder %s53, %s55
      %p62 = scmp.eq.s32.totalorder %s17, 1
      %p63 = por %p61, %p62
      %p64 = scmp.ne.s32.totalorder %s55, %s56
      %p65 = scmp.eq.s32.totalorder %s17, 0
      %p66 = por %p64, %p65
      %p67 = scmp.ne.s32.totalorder %s55, %s56
      %p68 = scmp.eq.s32.totalorder %s18, 1
      %p69 = por %p67, %p68
      %p71 = scmp.ne.s32.totalorder %s56, %s70
      %p72 = scmp.eq.s32.totalorder %s18, 0
      %p73 = por %p71, %p72
      %s74 = ssub.s32 %s19, %s31
      %s75 = ssub.s32 %s20, %s27
      %s76 = sor.u32 %s74, %s75
      %p77 = scmp.eq.s32.totalorder %s76, 0
      %s79 = sadd.s32 %s78, 1
      %s80 = scalar_select %p77, %s78, %s79
      %p83 = pneg %p77
      %p84 = scmp.eq.s32.totalorder %s12, 1
      %p85 = por %p83, %p84
      %p86 = scmp.ne.s32.totalorder %s78, %s81
      %p87 = scmp.eq.s32.totalorder %s12, 0
      %p88 = por %p86, %p87
      %p89 = scmp.ne.s32.totalorder %s78, %s81
      %p90 = scmp.eq.s32.totalorder %s17, 1
      %p91 = por %p89, %p90
      %p92 = scmp.ne.s32.totalorder %s81, %s82
      %p93 = scmp.eq.s32.totalorder %s17, 0
      %p94 = por %p92, %p93
      %p95 = scmp.ne.s32.totalorder %s81, %s82
      %p96 = scmp.eq.s32.totalorder %s18, 1
      %p97 = por %p95, %p96
      %p99 = scmp.ne.s32.totalorder %s82, %s98
      %p100 = scmp.eq.s32.totalorder %s18, 0
      %p101 = por %p99, %p100
      %s102 = ssub.s32 %s19, %s31
      %p103 = scmp.eq.s32.totalorder %s102, 0
      %s105 = sadd.s32 %s104, 1
      %s106 = scalar_select %p103, %s104, %s105
      %p109 = pneg %p103
      %p110 = scmp.eq.s32.totalorder %s12, 1
      %p111 = por %p109, %p110
      %p112 = scmp.ne.s32.totalorder %s104, %s107
      %p113 = scmp.eq.s32.totalorder %s12, 0
      %p114 = por %p112, %p113
      %p115 = scmp.ne.s32.totalorder %s104, %s107
      %p116 = scmp.eq.s32.totalorder %s17, 1
      %p117 = por %p115, %p116
      %p118 = scmp.ne.s32.totalorder %s107, %s108
      %p119 = scmp.eq.s32.totalorder %s17, 0
      %p120 = por %p118, %p119
      %p121 = scmp.ne.s32.totalorder %s107, %s108
      %p122 = scmp.eq.s32.totalorder %s18, 1
      %p123 = por %p121, %p122
      %p125 = scmp.ne.s32.totalorder %s108, %s124
      %p126 = scmp.eq.s32.totalorder %s18, 0
      %p127 = por %p125, %p126
      %s128 = ssub.s32 %s19, %s31
      %p129 = scmp.eq.s32.totalorder %s128, 0
      %s131 = sadd.s32 %s130, 1
      %s132 = scalar_select %p129, %s130, %s131
      %p135 = pneg %p129
      %p136 = scmp.eq.s32.totalorder %s12, 1
      %p137 = por %p135, %p136
      %p138 = scmp.ne.s32.totalorder %s130, %s133
      %p139 = scmp.eq.s32.totalorder %s12, 0
      %p140 = por %p138, %p139
      %p141 = scmp.ne.s32.totalorder %s130, %s133
      %p142 = scmp.eq.s32.totalorder %s17, 1
      %p143 = por %p141, %p142
      %p144 = scmp.ne.s32.totalorder %s133, %s134
      %p145 = scmp.eq.s32.totalorder %s17, 0
      %p146 = por %p144, %p145
      %p147 = scmp.ne.s32.totalorder %s133, %s134
      %p148 = scmp.eq.s32.totalorder %s18, 1
      %p149 = por %p147, %p148
      %p151 = scmp.ne.s32.totalorder %s134, %s150
      %p152 = scmp.eq.s32.totalorder %s18, 0
      %p153 = por %p151, %p152
      %s154 = ssub.s32 %s19, %s31
      %s155 = ssub.s32 %s20, %s27
      %s156 = sor.u32 %s154, %s155
      %p157 = scmp.eq.s32.totalorder %s156, 0
      %s159 = sadd.s32 %s158, 1
      %s160 = scalar_select %p157, %s158, %s159
      %p163 = pneg %p157
      %p164 = scmp.eq.s32.totalorder %s12, 1
      %p165 = por %p163, %p164
      %p166 = scmp.ne.s32.totalorder %s158, %s161
      %p167 = scmp.eq.s32.totalorder %s12, 0
      %p168 = por %p166, %p167
      %p169 = scmp.ne.s32.totalorder %s158, %s161
      %p170 = scmp.eq.s32.totalorder %s17, 1
      %p171 = por %p169, %p170
      %p172 = scmp.ne.s32.totalorder %s161, %s162
      %p173 = scmp.eq.s32.totalorder %s17, 0
      %p174 = por %p172, %p173
      %p175 = scmp.ne.s32.totalorder %s161, %s162
      %p176 = scmp.eq.s32.totalorder %s18, 1
      %p177 = por %p175, %p176
      %p179 = scmp.ne.s32.totalorder %s162, %s178
      %p180 = scmp.eq.s32.totalorder %s18, 0
      %p181 = por %p179, %p180
      %p182 = scmp.le.s32.totalorder 1, %s12
      %p183 = scmp.lt.s32.totalorder %s12, 3
      %p184 = pnand %p182, %p183
      %p185 = pneg %p184
      // Predicated region
      $region9: #{bottleneck_kagn_conv2d.1} parent=5 // pred_check
        _
      $region10: #{bottleneck_kagn_conv2d.1} parent=5 // pred_check_branch
        %187 = sbr.rel (%p184) target = $region12
      $region11: #{bottleneck_kagn_conv2d.1} parent=5 // pred_region
        %s188 = ssub.s32 %s12, 1
        // Predicated region
        $region13: #{bottleneck_kagn_conv2d.1} parent=11 // pred_check
          %p189 = pneg %p45
        $region14: #{bottleneck_kagn_conv2d.1} parent=11 // pred_check_branch
          %191 = sbr.rel (%p189) target = $region16
        $region15: #{bottleneck_kagn_conv2d.1} parent=11 // pred_region
          %s193 = ssub.s32 16, 16
          %194 = vsyncadd [#allocation3], %s193
          %s196 = sshll.u32 %s0, 4
          %s197 = int_to_ptr.vmem [resolvable:$true] %s196
          %199 = dma.vmem_to_smem %s197, 16, [#allocation2], [#allocation3]
        $region16: #{bottleneck_kagn_conv2d.1} parent=11 // pred_fallthru
          _
        // Predicated region
        $region17: #{bottleneck_kagn_conv2d.1} parent=11 // pred_check
          %p200 = pneg %p66
        $region18: #{bottleneck_kagn_conv2d.1} parent=11 // pred_check_branch
          %202 = sbr.rel (%p200) target = $region20
        $region19: #{bottleneck_kagn_conv2d.1} parent=11 // pred_region
          _
        $region20: #{bottleneck_kagn_conv2d.1} parent=11 // pred_fallthru
          _
        // Predicated region
        $region21: #{bottleneck_kagn_conv2d.1} parent=11 // pred_check
          %p203 = pneg %p120
        $region22: #{bottleneck_kagn_conv2d.1} parent=11 // pred_check_branch
          %205 = sbr.rel (%p203) target = $region24
        $region23: #{bottleneck_kagn_conv2d.1} parent=11 // pred_region
          %p206 = scmp.lt.s32.totalorder %s21, 0
          %s207 = scalar_select %p206, %s21, 0
          %s208 = smul.addr %s207, 2
          %s209 = smul.addr %s208, 4
          %s210 = scalar_lea.vmem %s3, %s209
        $region24: #{bottleneck_kagn_conv2d.1} parent=11 // pred_fallthru
          _
        // Predicated region
        $region25: #{bottleneck_kagn_conv2d.1} parent=11 // pred_check
          %p211 = pneg %p146
        $region26: #{bottleneck_kagn_conv2d.1} parent=11 // pred_check_branch
          %213 = sbr.rel (%p211) target = $region28
        $region27: #{bottleneck_kagn_conv2d.1} parent=11 // pred_region
          %p214 = scmp.lt.s32.totalorder %s21, 0
          %s215 = scalar_select %p214, %s21, 0
          %s216 = smul.addr %s215, 4
          %s217 = scalar_lea.vmem %s4, %s216
        $region28: #{bottleneck_kagn_conv2d.1} parent=11 // pred_fallthru
          _
      $region12: #{bottleneck_kagn_conv2d.1} parent=5 // pred_fallthru
        _
      %p218 = scmp.lt.s32.totalorder %s12, 2
      // Predicated region
      $region29: #{bottleneck_kagn_conv2d.1} parent=5 // pred_check
        %p219 = pneg %p218
      $region30: #{bottleneck_kagn_conv2d.1} parent=5 // pred_check_branch
        %221 = sbr.rel (%p219) target = $region32
      $region31: #{bottleneck_kagn_conv2d.1} parent=5 // pred_region
        // Predicated region
        $region33: #{bottleneck_kagn_conv2d.1} parent=31 // pred_check
          %p222 = pneg %p88
        $region34: #{bottleneck_kagn_conv2d.1} parent=31 // pred_check_branch
          %224 = sbr.rel (%p222) target = $region36
        $region35: #{bottleneck_kagn_conv2d.1} parent=31 // pred_region
          %p225 = scmp.lt.s32.totalorder %s19, 0
          %s226 = scalar_select %p225, %s19, 0
          %p227 = scmp.lt.s32.totalorder %s20, 1
          %s228 = scalar_select %p227, %s20, 1
          %s229 = smul.addr %s228, 3
          %s230 = smul.addr %s226, 6
          %s231 = sadd.s32 %s229, %s230
          %s232 = smul.addr %s231, 4
          %s233 = scalar_lea.vmem %s2, %s232
        $region36: #{bottleneck_kagn_conv2d.1} parent=31 // pred_fallthru
          _
      $region32: #{bottleneck_kagn_conv2d.1} parent=5 // pred_fallthru
        _
      %p234 = scmp.le.s32.totalorder 1, %s12
      %p235 = scmp.lt.s32.totalorder %s12, 3
      %p236 = pnand %p234, %p235
      %p237 = pneg %p236
      // Predicated region
      $region37: #{bottleneck_kagn_conv2d.1} parent=5 // pred_check
        _
      $region38: #{bottleneck_kagn_conv2d.1} parent=5 // pred_check_branch
        %239 = sbr.rel (%p236) target = $region40
      $region39: #{bottleneck_kagn_conv2d.1} parent=5 // pred_region
        %s240 = ssub.s32 %s12, 1
        // Predicated region
        $region41: #{bottleneck_kagn_conv2d.1} parent=39 // pred_check
          %p241 = pneg %p45
        $region42: #{bottleneck_kagn_conv2d.1} parent=39 // pred_check_branch
          %243 = sbr.rel (%p241) target = $region44
        $region43: #{bottleneck_kagn_conv2d.1} parent=39 // pred_region
          %244 = dma.done [#allocation3], 16
        $region44: #{bottleneck_kagn_conv2d.1} parent=39 // pred_fallthru
          _
        %245 = sfence
        %p246 = pneg %p45
        %p247 = pneg %p42
        %p248 = pneg %p66
        %p249 = pneg %p63
        %p250 = scmp.lt.s32.totalorder %s21, 0
        %s251 = scalar_select %p250, %s21, 0
        %p252 = scmp.lt.s32.totalorder %s22, 1
        %s253 = scalar_select %p252, %s22, 1
        %s254 = smul.addr %s253, 3
        %s255 = smul.addr %s251, 6
        %s256 = sadd.s32 %s254, %s255
        %s257 = smul.addr %s256, 4
        %s258 = scalar_lea.vmem %s2, %s257
        %p259 = pneg %p94
        %p260 = pneg %p91
        %p261 = scmp.lt.s32.totalorder %s21, 0
        %s262 = scalar_select %p261, %s21, 0
        %s263 = smul.addr %s262, 2
        %s264 = smul.addr %s263, 4
        %s265 = scalar_lea.vmem %s3, %s264
        %p266 = pneg %p120
        %p267 = pneg %p117
        %p268 = scmp.lt.s32.totalorder %s21, 0
        %s269 = scalar_select %p268, %s21, 0
        %s270 = smul.addr %s269, 4
        %s271 = scalar_lea.vmem %s4, %s270
        %p272 = pneg %p146
        %p273 = pneg %p143
        %p274 = pneg %p174
        %p275 = pneg %p171
        %p276 = scmp.lt.s32.totalorder %s21, 0
        %s277 = scalar_select %p276, %s21, 0
        %p278 = scmp.lt.s32.totalorder %s22, 1
        %s279 = scalar_select %p278, %s22, 1
        %s280 = smul.addr %s279, 3
        %s281 = smul.addr %s277, 6
        %s282 = sadd.s32 %s280, %s281
        %s283 = smul.addr %s282, 8
        %s284 = scalar_lea.vmem %s5, %s283
        %p285 = scmp.lt.s32.totalorder %s21, 0
        %s286 = scalar_select %p285, %s21, 0
        %p287 = scmp.lt.s32.totalorder %s22, 1
        %s288 = scalar_select %p287, %s22, 1
        %s289 = smul.addr %s288, 3
        %s290 = smul.addr %s286, 6
        %s291 = sadd.s32 %s289, %s290
        %s292 = smul.addr %s291, 4
        %s293 = scalar_lea.vmem %s2, %s292
        %p294 = scmp.lt.s32.totalorder %s21, 0
        %s295 = scalar_select %p294, %s21, 0
        %s296 = smul.addr %s295, 2
        %s297 = smul.addr %s296, 4
        %s298 = scalar_lea.vmem %s3, %s297
        %p299 = scmp.lt.s32.totalorder %s21, 0
        %s300 = scalar_select %p299, %s21, 0
        %s301 = smul.addr %s300, 4
        %s302 = scalar_lea.vmem %s4, %s301
        %p303 = scmp.lt.s32.totalorder %s21, 0
        %s304 = scalar_select %p303, %s21, 0
        %p305 = scmp.lt.s32.totalorder %s22, 1
        %s306 = scalar_select %p305, %s22, 1
        %s307 = smul.addr %s306, 3
        %s308 = smul.addr %s304, 6
        %s309 = sadd.s32 %s307, %s308
        %s310 = smul.addr %s309, 8
        %s311 = scalar_lea.vmem %s5, %s310
        %v313 = vld [vmem:[%s293] sm:$0xff]
        %v314 = vld [vmem:[%s293 + $0x8] sm:$0xf]
        %v315 = vld [vmem:[%s1] ss:$2 sm:$0x7]
        %s316 = scalar_lea.vmem %s1, 1
        %v317 = vld [vmem:[%s316] ss:$2 sm:$0x7]
        %v318 = vxor.u32 %v313, 2147483648
        %v319 = vxor.u32 %v314, 2147483648
        %v320 = vmul.f32 %v318, 1.442695
        %v321 = vpow.pop %v320
        %v322 = vmul.f32 %v319, 1.442695
        %v323 = vpow.pop %v322
        %v324 = vadd.f32 %v321, 1.0
        %v325 = vadd.f32 %v323, 1.0
        %v326 = vrcp.pop %v324
        %v327 = vmul.f32 1.0, %v326
        %v328 = vrcp.pop %v325
        %v329 = vmul.f32 1.0, %v328
        %v330 = vmul.f32 %v313, %v327
        %v331 = vmul.f32 %v314, %v329
        %v333 = vcombine.high %v330, %v330
        %v335 = vpack.c.bf16 %v330, %v330
        %v336 = vpack.c.bf16 %v333, %v333
        %v337 = vpack.c.bf16 %v331, %v331
        %v338 = vld [vmem:[%s302] sm:$0xf]
        %340 = vset.pattern.permute.xlu0 0
        %341 = vperm.xlu0 %340, %v338
        %v342 = vpop.permute.xlu0 %341
        %v346 = vlaneseq
        %v347 = vshrl.u32 %v346, 7
        %v348 = vsub.s32 0, %v347
        %v349 = vrot.slane %v313, %v348
        %v350 = vlaneseq
        %v351 = vshrl.u32 %v350, 7
        %v352 = vsub.s32 4, %v351
        %v353 = vrot.slane %v313, %v352
        %v354 = vlaneseq
        %v355 = vshrl.u32 %v354, 7
        %v356 = vsub.s32 0, %v355
        %v357 = vrot.slane %v314, %v356
        %v361 = vlaneseq
        %v362 = vshrl.u32 %v361, 7
        %v363 = vsub.s32 0, %v362
        %v364 = vrot.slane %v349, %v363
        %v365 = vlaneseq
        %v366 = vshrl.u32 %v365, 7
        %v367 = vsub.s32 0, %v366
        %v368 = vrot.slane %v353, %v367
        %v369 = vlaneseq
        %v370 = vshrl.u32 %v369, 7
        %v371 = vsub.s32 0, %v370
        %v372 = vrot.slane %v357, %v371
        %v373 = vmul.f32 %v342, %v364
        %v374 = vmul.f32 %v342, %v368
        %v375 = vmul.f32 %v342, %v372
        %v376 = vadd.f32 %v373, 0.0
        %v377 = vadd.f32 %v374, 0.0
        %v378 = vadd.f32 %v375, 0.0
        %379 = vset.pattern.permute.xlu0 1
        %380 = vperm.xlu0 %379, %v338
        %v381 = vpop.permute.xlu0 %380
        %v383 = vlaneseq
        %v384 = vshrl.u32 %v383, 7
        %v385 = vsub.s32 1, %v384
        %v386 = vrot.slane %v313, %v385
        %v387 = vlaneseq
        %v388 = vshrl.u32 %v387, 7
        %v389 = vsub.s32 5, %v388
        %v390 = vrot.slane %v313, %v389
        %v391 = vlaneseq
        %v392 = vshrl.u32 %v391, 7
        %v393 = vsub.s32 1, %v392
        %v394 = vrot.slane %v314, %v393
        %v398 = vlaneseq
        %v399 = vshrl.u32 %v398, 7
        %v400 = vsub.s32 1, %v399
        %v401 = vrot.slane %v386, %v400
        %v402 = vlaneseq
        %v403 = vshrl.u32 %v402, 7
        %v404 = vsub.s32 1, %v403
        %v405 = vrot.slane %v390, %v404
        %v406 = vlaneseq
        %v407 = vshrl.u32 %v406, 7
        %v408 = vsub.s32 1, %v407
        %v409 = vrot.slane %v394, %v408
        %v410 = vmul.f32 %v381, %v401
        %v411 = vmul.f32 %v381, %v405
        %v412 = vmul.f32 %v381, %v409
        %v413 = vadd.f32 %v376, %v410
        %v414 = vadd.f32 %v377, %v411
        %v415 = vadd.f32 %v378, %v412
        %416 = vset.pattern.permute.xlu0 2
        %417 = vperm.xlu0 %416, %v338
        %v418 = vpop.permute.xlu0 %417
        %v420 = vlaneseq
        %v421 = vshrl.u32 %v420, 7
        %v422 = vsub.s32 2, %v421
        %v423 = vrot.slane %v313, %v422
        %v424 = vlaneseq
        %v425 = vshrl.u32 %v424, 7
        %v426 = vsub.s32 6, %v425
        %v427 = vrot.slane %v313, %v426
        %v428 = vlaneseq
        %v429 = vshrl.u32 %v428, 7
        %v430 = vsub.s32 2, %v429
        %v431 = vrot.slane %v314, %v430
        %v435 = vlaneseq
        %v436 = vshrl.u32 %v435, 7
        %v437 = vsub.s32 2, %v436
        %v438 = vrot.slane %v423, %v437
        %v439 = vlaneseq
        %v440 = vshrl.u32 %v439, 7
        %v441 = vsub.s32 2, %v440
        %v442 = vrot.slane %v427, %v441
        %v443 = vlaneseq
        %v444 = vshrl.u32 %v443, 7
        %v445 = vsub.s32 2, %v444
        %v446 = vrot.slane %v431, %v445
        %v447 = vmul.f32 %v418, %v438
        %v448 = vmul.f32 %v418, %v442
        %v449 = vmul.f32 %v418, %v446
        %v450 = vadd.f32 %v413, %v447
        %v451 = vadd.f32 %v414, %v448
        %v452 = vadd.f32 %v415, %v449
        %453 = vset.pattern.permute.xlu0 3
        %454 = vperm.xlu0 %453, %v338
        %v455 = vpop.permute.xlu0 %454
        %v457 = vlaneseq
        %v458 = vshrl.u32 %v457, 7
        %v459 = vsub.s32 3, %v458
        %v460 = vrot.slane %v313, %v459
        %v461 = vlaneseq
        %v462 = vshrl.u32 %v461, 7
        %v463 = vsub.s32 7, %v462
        %v464 = vrot.slane %v313, %v463
        %v465 = vlaneseq
        %v466 = vshrl.u32 %v465, 7
        %v467 = vsub.s32 3, %v466
        %v468 = vrot.slane %v314, %v467
        %v472 = vlaneseq
        %v473 = vshrl.u32 %v472, 7
        %v474 = vsub.s32 3, %v473
        %v475 = vrot.slane %v460, %v474
        %v476 = vlaneseq
        %v477 = vshrl.u32 %v476, 7
        %v478 = vsub.s32 3, %v477
        %v479 = vrot.slane %v464, %v478
        %v480 = vlaneseq
        %v481 = vshrl.u32 %v480, 7
        %v482 = vsub.s32 3, %v481
        %v483 = vrot.slane %v468, %v482
        %v484 = vmul.f32 %v455, %v475
        %v485 = vmul.f32 %v455, %v479
        %v486 = vmul.f32 %v455, %v483
        %v487 = vadd.f32 %v450, %v484
        %v488 = vadd.f32 %v451, %v485
        %v489 = vadd.f32 %v452, %v486
        %v490 = vtanh.pop %v487
        %v491 = vtanh.pop %v488
        %v492 = vtanh.pop %v489
        %v494 = vlaneseq
        %v495 = vshrl.u32 %v494, 7
        %v496 = vsub.s32 0, %v495
        %v497 = vrot.slane %v315, %v496
        %v498 = vlaneseq
        %v499 = vshrl.u32 %v498, 7
        %v500 = vsub.s32 1, %v499
        %v501 = vrot.slane %v315, %v500
        %v502 = vlaneseq
        %v503 = vshrl.u32 %v502, 7
        %v504 = vsub.s32 2, %v503
        %v505 = vrot.slane %v315, %v504
        %v509 = vmul.f32 %v497, 0.7310586
        %v510 = vmul.f32 %v501, 0.7310586
        %v511 = vmul.f32 %v505, 0.7310586
        %v512 = vpack.c.bf16 %v509, %v509
        %v513 = vpack.c.bf16 %v510, %v510
        %v514 = vpack.c.bf16 %v511, %v511
        %v515 = vxor.u32 %v490, 2147483648
        %v516 = vxor.u32 %v491, 2147483648
        %v517 = vxor.u32 %v492, 2147483648
        %v518 = vmul.f32 %v515, 1.442695
        %v519 = vpow.pop %v518
        %v520 = vmul.f32 %v516, 1.442695
        %v521 = vpow.pop %v520
        %v522 = vmul.f32 %v517, 1.442695
        %v523 = vpow.pop %v522
        %v524 = vadd.f32 %v519, 1.0
        %v525 = vadd.f32 %v521, 1.0
        %v526 = vadd.f32 %v523, 1.0
        %v527 = vrcp.pop %v524
        %v528 = vmul.f32 1.0, %v527
        %v529 = vrcp.pop %v525
        %v530 = vmul.f32 1.0, %v529
        %v531 = vrcp.pop %v526
        %v532 = vmul.f32 1.0, %v531
        %v533 = vmul.f32 %v490, %v528
        %v534 = vmul.f32 %v491, %v530
        %v535 = vmul.f32 %v492, %v532
        %v536 = vmul.f32 %v533, %v497
        %v537 = vmul.f32 %v534, %v501
        %v538 = vmul.f32 %v535, %v505
        %v539 = vpack.c.bf16 %v536, %v536
        %v540 = vpack.c.bf16 %v537, %v537
        %v541 = vpack.c.bf16 %v538, %v538
        %v542 = vmul.f32 %v490, %v490
        %v543 = vmul.f32 %v491, %v491
        %v544 = vmul.f32 %v492, %v492
        %s545 = sld [smem:[#allocation2 + $0x2]]
        %v546 = vstv %s545
        %v547 = vsub.f32 %v542, %v546
        %v548 = vsub.f32 %v543, %v546
        %v549 = vsub.f32 %v544, %v546
        %v550 = vxor.u32 %v547, 2147483648
        %v551 = vxor.u32 %v548, 2147483648
        %v552 = vxor.u32 %v549, 2147483648
        %v553 = vmul.f32 %v550, 1.442695
        %v554 = vpow.pop %v553
        %v555 = vmul.f32 %v551, 1.442695
        %v556 = vpow.pop %v555
        %v557 = vmul.f32 %v552, 1.442695
        %v558 = vpow.pop %v557
        %v559 = vadd.f32 %v554, 1.0
        %v560 = vadd.f32 %v556, 1.0
        %v561 = vadd.f32 %v558, 1.0
        %v562 = vrcp.pop %v559
        %v563 = vmul.f32 1.0, %v562
        %v564 = vrcp.pop %v560
        %v565 = vmul.f32 1.0, %v564
        %v566 = vrcp.pop %v561
        %v567 = vmul.f32 1.0, %v566
        %v568 = vmul.f32 %v547, %v563
        %v569 = vmul.f32 %v548, %v565
        %v570 = vmul.f32 %v549, %v567
        %v571 = vmul.f32 %v568, %v497
        %v572 = vmul.f32 %v569, %v501
        %v573 = vmul.f32 %v570, %v505
        %v574 = vpack.c.bf16 %v571, %v571
        %v575 = vpack.c.bf16 %v572, %v572
        %v576 = vpack.c.bf16 %v573, %v573
        %v577 = vmul.f32 %v490, %v547
        %v578 = vmul.f32 %v491, %v548
        %v579 = vmul.f32 %v492, %v549
        %s580 = sld [smem:[#allocation2 + $0x3]]
        %v581 = vstv %s580
        %v582 = vmul.f32 %v581, %v490
        %v583 = vmul.f32 %v581, %v491
        %v584 = vmul.f32 %v581, %v492
        %v585 = vsub.f32 %v577, %v582
        %v586 = vsub.f32 %v578, %v583
        %v587 = vsub.f32 %v579, %v584
        %v588 = vxor.u32 %v585, 2147483648
        %v589 = vxor.u32 %v586, 2147483648
        %v590 = vxor.u32 %v587, 2147483648
        %v591 = vmul.f32 %v588, 1.442695
        %v592 = vpow.pop %v591
        %v593 = vmul.f32 %v589, 1.442695
        %v594 = vpow.pop %v593
        %v595 = vmul.f32 %v590, 1.442695
        %v596 = vpow.pop %v595
        %v597 = vadd.f32 %v592, 1.0
        %v598 = vadd.f32 %v594, 1.0
        %v599 = vadd.f32 %v596, 1.0
        %v600 = vrcp.pop %v597
        %v601 = vmul.f32 1.0, %v600
        %v602 = vrcp.pop %v598
        %v603 = vmul.f32 1.0, %v602
        %v604 = vrcp.pop %v599
        %v605 = vmul.f32 1.0, %v604
        %v606 = vmul.f32 %v585, %v601
        %v607 = vmul.f32 %v586, %v603
        %v608 = vmul.f32 %v587, %v605
        %v609 = vmul.f32 %v606, %v497
        %v610 = vmul.f32 %v607, %v501
        %v611 = vmul.f32 %v608, %v505
        %v612 = vpack.c.bf16 %v609, %v609
        %v613 = vpack.c.bf16 %v610, %v610
        %v614 = vpack.c.bf16 %v611, %v611
        %v618 = vrot.slane %v539, 4
        %v619 = vrot.slane %v540, 4
        %v620 = vrot.slane %v541, 4
        %v624 = vrot.slane %v574, 2
        %v625 = vrot.slane %v575, 2
        %v626 = vrot.slane %v576, 2
        %vm627 = vcmask 1041408
        %v630 = vsel %vm627, %v335, %v512
        %v633 = vsel %vm627, %v336, %v513
        %v636 = vsel %vm627, %v337, %v514
        %vm637 = vcmask 1043456
        %v639 = vsel %vm637, %v630, %v618
        %v641 = vsel %vm637, %v633, %v619
        %v643 = vsel %vm637, %v636, %v620
        %vm644 = vcmask 1045504
        %v646 = vsel %vm644, %v639, %v624
        %v649 = vsel %vm644, %v641, %v625
        %v652 = vsel %vm644, %v643, %v626
        %vm660 = vcmask 1041408
        %v661 = vrot.slane %v646, 6
        %v662 = vrot.slane %v649, 6
        %v663 = vrot.slane %v652, 6
        %v664 = vrot.slane %v612, 6
        %v665 = vsel %vm660, %v661, %v664
        %v666 = vrot.slane %v613, 6
        %v667 = vsel %vm660, %v662, %v666
        %v668 = vrot.slane %v614, 6
        %v669 = vsel %vm660, %v663, %v668
        %670 = vrot.lane.b32.xlu0 %v661, 127
        %v671 = vpop.permute.xlu0 %670
        %672 = vrot.lane.b32.xlu0 %v662, 127
        %v673 = vpop.permute.xlu0 %672
        %674 = vrot.lane.b32.xlu0 %v663, 127
        %v675 = vpop.permute.xlu0 %674
        %676 = vrot.lane.b32.xlu0 %v665, 127
        %v677 = vpop.permute.xlu0 %676
        %678 = vrot.lane.b32.xlu0 %v667, 127
        %v679 = vpop.permute.xlu0 %678
        %680 = vrot.lane.b32.xlu0 %v669, 127
        %v681 = vpop.permute.xlu0 %680
        %vm682 = vcmask 1039360
        %v683 = vsel %vm682, %v671, %v673
        %v684 = vsel %vm682, %v673, %v675
        %v685 = vsel %vm682, %v677, %v679
        %v686 = vsel %vm682, %v679, %v681
        %vm687 = vcmask 1043456
        %v688 = vrot.slane %v646, 4
        %v689 = vrot.slane %v649, 4
        %v690 = vrot.slane %v652, 4
        %v691 = vrot.slane %v612, 4
        %v692 = vsel %vm687, %v688, %v691
        %v693 = vrot.slane %v613, 4
        %v694 = vsel %vm687, %v689, %v693
        %v695 = vrot.slane %v614, 4
        %v696 = vsel %vm687, %v690, %v695
        %697 = vrot.lane.b32.xlu0 %v688, 126
        %v698 = vpop.permute.xlu0 %697
        %699 = vrot.lane.b32.xlu0 %v689, 126
        %v700 = vpop.permute.xlu0 %699
        %701 = vrot.lane.b32.xlu0 %v690, 126
        %v702 = vpop.permute.xlu0 %701
        %703 = vrot.lane.b32.xlu0 %v692, 126
        %v704 = vpop.permute.xlu0 %703
        %705 = vrot.lane.b32.xlu0 %v694, 126
        %v706 = vpop.permute.xlu0 %705
        %707 = vrot.lane.b32.xlu0 %v696, 126
        %v708 = vpop.permute.xlu0 %707
        %vm709 = vcmask 1031168
        %v710 = vsel %vm709, %v698, %v700
        %v711 = vsel %vm709, %v700, %v702
        %v712 = vsel %vm709, %v704, %v706
        %v713 = vsel %vm709, %v706, %v708
        %vm714 = vcmask 1045504
        %v715 = vrot.slane %v646, 2
        %v716 = vrot.slane %v649, 2
        %v717 = vrot.slane %v652, 2
        %v718 = vrot.slane %v612, 2
        %v719 = vsel %vm714, %v715, %v718
        %v720 = vrot.slane %v613, 2
        %v721 = vsel %vm714, %v716, %v720
        %v722 = vrot.slane %v614, 2
        %v723 = vsel %vm714, %v717, %v722
        %724 = vrot.lane.b32.xlu0 %v715, 110
        %v725 = vpop.permute.xlu0 %724
        %726 = vrot.lane.b32.xlu0 %v716, 110
        %v727 = vpop.permute.xlu0 %726
        %728 = vrot.lane.b32.xlu0 %v717, 110
        %v729 = vpop.permute.xlu0 %728
        %730 = vrot.lane.b32.xlu0 %v719, 110
        %v731 = vpop.permute.xlu0 %730
        %732 = vrot.lane.b32.xlu0 %v721, 110
        %v733 = vpop.permute.xlu0 %732
        %734 = vrot.lane.b32.xlu0 %v723, 110
        %v735 = vpop.permute.xlu0 %734
        %vm736 = vcmask 900096
        %v737 = vsel %vm736, %v725, %v727
        %v738 = vsel %vm736, %v727, %v729
        %v739 = vsel %vm736, %v731, %v733
        %v740 = vsel %vm736, %v733, %v735
        %744 = vrot.lane.b32.xlu0 %v646, 109
        %v745 = vpop.permute.xlu0 %744
        %746 = vrot.lane.b32.xlu0 %v649, 109
        %v747 = vpop.permute.xlu0 %746
        %748 = vrot.lane.b32.xlu0 %v652, 109
        %v749 = vpop.permute.xlu0 %748
        %750 = vrot.lane.b32.xlu0 %v612, 109
        %v751 = vpop.permute.xlu0 %750
        %752 = vrot.lane.b32.xlu0 %v613, 109
        %v753 = vpop.permute.xlu0 %752
        %754 = vrot.lane.b32.xlu0 %v614, 109
        %v755 = vpop.permute.xlu0 %754
        %vm756 = vcmask 891904
        %v757 = vsel %vm756, %v745, %v747
        %v758 = vsel %vm756, %v747, %v749
        %v759 = vsel %vm756, %v751, %v753
        %v760 = vsel %vm756, %v753, %v755
        %764 = vrot.lane.b32.xlu0 %v661, 108
        %v765 = vpop.permute.xlu0 %764
        %766 = vrot.lane.b32.xlu0 %v662, 108
        %v767 = vpop.permute.xlu0 %766
        %768 = vrot.lane.b32.xlu0 %v663, 108
        %v769 = vpop.permute.xlu0 %768
        %770 = vrot.lane.b32.xlu0 %v665, 108
        %v771 = vpop.permute.xlu0 %770
        %772 = vrot.lane.b32.xlu0 %v667, 108
        %v773 = vpop.permute.xlu0 %772
        %774 = vrot.lane.b32.xlu0 %v669, 108
        %v775 = vpop.permute.xlu0 %774
        %vm776 = vcmask 883712
        %v777 = vsel %vm776, %v765, %v767
        %v778 = vsel %vm776, %v767, %v769
        %v779 = vsel %vm776, %v771, %v773
        %v780 = vsel %vm776, %v773, %v775
        %781 = vrot.lane.b32.xlu0 %v688, 92
        %v782 = vpop.permute.xlu0 %781
        %783 = vrot.lane.b32.xlu0 %v689, 92
        %v784 = vpop.permute.xlu0 %783
        %785 = vrot.lane.b32.xlu0 %v690, 92
        %v786 = vpop.permute.xlu0 %785
        %787 = vrot.lane.b32.xlu0 %v692, 92
        %v788 = vpop.permute.xlu0 %787
        %789 = vrot.lane.b32.xlu0 %v694, 92
        %v790 = vpop.permute.xlu0 %789
        %791 = vrot.lane.b32.xlu0 %v696, 92
        %v792 = vpop.permute.xlu0 %791
        %vm793 = vcmask 752640
        %v794 = vsel %vm793, %v782, %v784
        %v795 = vsel %vm793, %v784, %v786
        %v796 = vsel %vm793, %v788, %v790
        %v797 = vsel %vm793, %v790, %v792
        %798 = vrot.lane.b32.xlu0 %v715, 91
        %v799 = vpop.permute.xlu0 %798
        %800 = vrot.lane.b32.xlu0 %v716, 91
        %v801 = vpop.permute.xlu0 %800
        %802 = vrot.lane.b32.xlu0 %v717, 91
        %v803 = vpop.permute.xlu0 %802
        %804 = vrot.lane.b32.xlu0 %v719, 91
        %v805 = vpop.permute.xlu0 %804
        %806 = vrot.lane.b32.xlu0 %v721, 91
        %v807 = vpop.permute.xlu0 %806
        %808 = vrot.lane.b32.xlu0 %v723, 91
        %v809 = vpop.permute.xlu0 %808
        %vm810 = vcmask 744448
        %v811 = vsel %vm810, %v799, %v801
        %v812 = vsel %vm810, %v801, %v803
        %v813 = vsel %vm810, %v805, %v807
        %v814 = vsel %vm810, %v807, %v809
        %818 = vrot.lane.b32.xlu0 %v646, 90
        %v819 = vpop.permute.xlu0 %818
        %820 = vrot.lane.b32.xlu0 %v649, 90
        %v821 = vpop.permute.xlu0 %820
        %822 = vrot.lane.b32.xlu0 %v652, 90
        %v823 = vpop.permute.xlu0 %822
        %824 = vrot.lane.b32.xlu0 %v612, 90
        %v825 = vpop.permute.xlu0 %824
        %826 = vrot.lane.b32.xlu0 %v613, 90
        %v827 = vpop.permute.xlu0 %826
        %828 = vrot.lane.b32.xlu0 %v614, 90
        %v829 = vpop.permute.xlu0 %828
        %vm830 = vcmask 736256
        %v831 = vsel %vm830, %v819, %v821
        %v832 = vsel %vm830, %v821, %v823
        %v833 = vsel %vm830, %v825, %v827
        %v834 = vsel %vm830, %v827, %v829
        %v840 = vsel %vm627, %v612, %v683
        %v844 = vsel %vm627, %v613, %v684
        %v848 = vsel %vm627, %v614, %v675
        %v852 = vsel %vm637, %v685, %v710
        %v856 = vsel %vm637, %v686, %v711
        %v860 = vsel %vm637, %v681, %v702
        %v864 = vsel %vm644, %v712, %v737
        %v868 = vsel %vm644, %v713, %v738
        %v872 = vsel %vm644, %v708, %v729
        %v876 = vsel %vm627, %v759, %v777
        %v880 = vsel %vm627, %v760, %v778
        %v884 = vsel %vm627, %v755, %v769
        %v888 = vsel %vm637, %v779, %v794
        %v892 = vsel %vm637, %v780, %v795
        %v896 = vsel %vm637, %v775, %v786
        %v900 = vsel %vm644, %v796, %v811
        %v904 = vsel %vm644, %v797, %v812
        %v908 = vsel %vm644, %v792, %v803
        %v910 = vld [vmem:[%s298] sm:$0xff]
        %v912 = vunpack.c.l.b16 %v910
        %v913 = vunpack.c.h.b16 %v910
        %v914 = vpack.c.b16 %v912, %v912
        %v915 = vpack.c.b16 %v913, %v913
        %vm917 = vcmask 424960
        %v919 = vsel %vm917, %v915, 0
        %v922 = vsel %vm627, %v833, 0
        %v925 = vsel %vm627, %v834, 0
        %v928 = vsel %vm627, %v829, 0
        %930 = vmatprep.subr.bf16.mxu0 %v649
        %931 = vmatpush1.bf16.msra.mxu0 %v646
        %932 = vmatprep.subr.bf16.mxu0 %v844
        %933 = vmatpush1.bf16.msra.mxu0 %v840
        %934 = vmatprep.subr.bf16.mxu0 %v856
        %935 = vmatpush1.bf16.msra.mxu0 %v852
        %936 = vmatprep.subr.bf16.mxu0 %v868
        %937 = vmatpush1.bf16.msra.mxu0 %v864
        %938 = vmatprep.subr.bf16.mxu0 %v740
        %939 = vmatpush1.bf16.msra.mxu0 %v739
        %940 = vmatprep.subr.bf16.mxu0 %v758
        %941 = vmatpush1.bf16.msra.mxu0 %v757
        %942 = vmatprep.subr.bf16.mxu0 %v880
        %943 = vmatpush1.bf16.msra.mxu0 %v876
        %944 = vmatprep.subr.bf16.mxu0 %v892
        %945 = vmatpush1.bf16.msra.mxu0 %v888
        %946 = vmatprep.subr.bf16.mxu0 %v904
        %947 = vmatpush1.bf16.msra.mxu0 %v900
        %948 = vmatprep.subr.bf16.mxu0 %v814
        %949 = vmatpush1.bf16.msra.mxu0 %v813
        %950 = vmatprep.subr.bf16.mxu0 %v832
        %951 = vmatpush1.bf16.msra.mxu0 %v831
        %952 = vmatprep.subr.bf16.mxu0 %v925
        %953 = vmatpush1.bf16.msra.mxu0 %v922
        %954 = vmatprep.subr.bf16.mxu0 0
        %955 = vmatpush1.bf16.msra.mxu0 0
        %956 = vmatprep.subr.bf16.mxu0 0
        %957 = vmatpush1.bf16.msra.mxu0 0
        %958 = vmatprep.subr.bf16.mxu0 0
        %959 = vmatpush1.bf16.msra.mxu0 0
        %960 = vmatprep.subr.bf16.mxu0 0
        %961 = vmatpush1.bf16.msra.mxu0 0
        %962 = vmatprep.mubr.bf16.mxu0 %v919
        %963 = vmatmul.mubr.bf16.gmra.mrb[0].mxu0 %v914
        %v964 = vpop.f32.mrb[0].mxu0
        %v965 = vadd.f32 0.0, %v964
        %v966 = vpop.f32.mrb[0].mxu0
        %v967 = vadd.f32 0.0, %v966
        %v968 = vpop.f32.mrb[0].mxu0
        %v969 = vpop.f32.mrb[0].mxu0
        %970 = vdwg.mxu0
        %971 = vmatprep.subr.bf16.mxu0 0
        %972 = vmatpush1.bf16.msra.mxu0 %v652
        %973 = vmatprep.subr.bf16.mxu0 0
        %974 = vmatpush1.bf16.msra.mxu0 %v848
        %975 = vmatprep.subr.bf16.mxu0 0
        %976 = vmatpush1.bf16.msra.mxu0 %v860
        %977 = vmatprep.subr.bf16.mxu0 0
        %978 = vmatpush1.bf16.msra.mxu0 %v872
        %979 = vmatprep.subr.bf16.mxu0 0
        %980 = vmatpush1.bf16.msra.mxu0 %v735
        %981 = vmatprep.subr.bf16.mxu0 0
        %982 = vmatpush1.bf16.msra.mxu0 %v749
        %983 = vmatprep.subr.bf16.mxu0 0
        %984 = vmatpush1.bf16.msra.mxu0 %v884
        %985 = vmatprep.subr.bf16.mxu0 0
        %986 = vmatpush1.bf16.msra.mxu0 %v896
        %987 = vmatprep.subr.bf16.mxu0 0
        %988 = vmatpush1.bf16.msra.mxu0 %v908
        %989 = vmatprep.subr.bf16.mxu0 0
        %990 = vmatpush1.bf16.msra.mxu0 %v809
        %991 = vmatprep.subr.bf16.mxu0 0
        %992 = vmatpush1.bf16.msra.mxu0 %v823
        %993 = vmatprep.subr.bf16.mxu0 0
        %994 = vmatpush1.bf16.msra.mxu0 %v928
        %995 = vmatprep.subr.bf16.mxu0 0
        %996 = vmatpush1.bf16.msra.mxu0 0
        %997 = vmatprep.subr.bf16.mxu0 0
        %998 = vmatpush1.bf16.msra.mxu0 0
        %999 = vmatprep.subr.bf16.mxu0 0
        %1000 = vmatpush1.bf16.msra.mxu0 0
        %1001 = vmatprep.subr.bf16.mxu0 0
        %1002 = vmatpush1.bf16.msra.mxu0 0
        %1003 = vmatprep.mubr.bf16.mxu0 %v919
        %1004 = vmatmul.mubr.bf16.gmra.mrb[0].mxu0 %v914
        %v1005 = vpop.f32.mrb[0].mxu0
        %v1006 = vadd.f32 0.0, %v1005
        %v1007 = vpop.f32.mrb[0].mxu0
        %v1008 = vpop.f32.mrb[0].mxu0
        %v1009 = vpop.f32.mrb[0].mxu0
        %1010 = vdwg.mxu0
        %v1012 = vlaneseq
        %v1013 = vshrl.u32 %v1012, 7
        %v1014 = vsub.s32 0, %v1013
        %v1015 = vrot.slane %v317, %v1014
        %v1016 = vlaneseq
        %v1017 = vshrl.u32 %v1016, 7
        %v1018 = vsub.s32 1, %v1017
        %v1019 = vrot.slane %v317, %v1018
        %v1020 = vlaneseq
        %v1021 = vshrl.u32 %v1020, 7
        %v1022 = vsub.s32 2, %v1021
        %v1023 = vrot.slane %v317, %v1022
        %v1027 = vmul.f32 %v965, %v1015
        %v1028 = vmul.f32 %v967, %v1019
        %v1029 = vmul.f32 %v1006, %v1023
        %v1030 = vadd.f32 %v1027, %v1028
        %vm1031 = vcmask 556032
        %v1032 = vsel %vm1031, %v1029, 0.0
        %v1033 = vadd.f32 %v1030, %v1032
        %1034 = vadd.xlane.f32.xlu0 %v1033
        %v1035 = vpop.xlane.xlu0 %1034
        %v1036 = vmul.f32 %v1035, 0.00390625
        %v1037 = vsub.f32 %v965, %v1036
        %v1038 = vsub.f32 %v967, %v1036
        %v1039 = vsub.f32 %v1006, %v1036
        %v1040 = vmul.f32 %v1037, %v1015
        %v1041 = vmul.f32 %v1038, %v1019
        %v1042 = vmul.f32 %v1039, %v1023
        %v1043 = vmul.f32 %v1040, %v1040
        %v1044 = vmul.f32 %v1041, %v1041
        %v1045 = vmul.f32 %v1042, %v1042
        %v1046 = vadd.f32 %v1043, %v1044
        %v1047 = vsel %vm1031, %v1045, 0.0
        %v1048 = vadd.f32 %v1046, %v1047
        %1049 = vadd.xlane.f32.xlu0 %v1048
        %v1050 = vpop.xlane.xlu0 %1049
        %v1051 = vmul.f32 %v1050, 0.00390625
        %v1052 = vadd.f32 %v1051, 1e-05
        %v1053 = vrsqrt.pop %v1052
        %v1054 = vmul.f32 %v1037, %v1053
        %v1055 = vmul.f32 %v1038, %v1053
        %v1056 = vmul.f32 %v1039, %v1053
        %v1057 = vxor.u32 %v1054, 2147483648
        %v1058 = vxor.u32 %v1055, 2147483648
        %v1059 = vxor.u32 %v1056, 2147483648
        %v1060 = vmul.f32 %v1057, 1.442695
        %v1061 = vpow.pop %v1060
        %v1062 = vmul.f32 %v1058, 1.442695
        %v1063 = vpow.pop %v1062
        %v1064 = vmul.f32 %v1059, 1.442695
        %v1065 = vpow.pop %v1064
        %v1066 = vadd.f32 %v1061, 1.0
        %v1067 = vadd.f32 %v1063, 1.0
        %v1068 = vadd.f32 %v1065, 1.0
        %v1069 = vrcp.pop %v1066
        %v1070 = vmul.f32 1.0, %v1069
        %v1071 = vrcp.pop %v1067
        %v1072 = vmul.f32 1.0, %v1071
        %v1073 = vrcp.pop %v1068
        %v1074 = vmul.f32 1.0, %v1073
        %v1075 = vmul.f32 %v1054, %v1070
        %v1076 = vmul.f32 %v1055, %v1072
        %v1077 = vmul.f32 %v1056, %v1074
        %1078 = vst [vmem:[%s311] sm:$0xff] %v1075
        %1079 = vst [vmem:[%s311 + $0x8] sm:$0xff] %v1076
        %1080 = vst.msk [vmem:[%s311 + $0x10] sm:$0xff] %vm1031, %v1077
        %p1081 = scmp.lt.s32.totalorder %s21, 0
        %s1082 = scalar_select %p1081, %s21, 0
        %p1083 = scmp.lt.s32.totalorder %s22, 1
        %s1084 = scalar_select %p1083, %s22, 1
        %s1085 = smul.addr %s1084, 3
        %s1086 = smul.addr %s1082, 6
        %s1087 = sadd.s32 %s1085, %s1086
        %s1088 = smul.addr %s1087, 8
        %s1089 = scalar_lea.vmem %s5, %s1088
        // Predicated region
        $region45: #{bottleneck_kagn_conv2d.1} parent=39 // pred_check
          %p1090 = pneg %p171
        $region46: #{bottleneck_kagn_conv2d.1} parent=39 // pred_check_branch
          %1092 = sbr.rel (%p1090) target = $region48
        $region47: #{bottleneck_kagn_conv2d.1} parent=39 // pred_region
          _
        $region48: #{bottleneck_kagn_conv2d.1} parent=39 // pred_fallthru
          _
      $region40: #{bottleneck_kagn_conv2d.1} parent=5 // pred_fallthru
        _
      %p1093 = scmp.le.s32.totalorder 2, %s12
      // Predicated region
      $region49: #{bottleneck_kagn_conv2d.1} parent=5 // pred_check
        %p1094 = pneg %p1093
      $region50: #{bottleneck_kagn_conv2d.1} parent=5 // pred_check_branch
        %1096 = sbr.rel (%p1094) target = $region52
      $region51: #{bottleneck_kagn_conv2d.1} parent=5 // pred_region
        %s1097 = ssub.s32 %s12, 2
        // Predicated region
        $region53: #{bottleneck_kagn_conv2d.1} parent=51 // pred_check
          %p1098 = pneg %p177
        $region54: #{bottleneck_kagn_conv2d.1} parent=51 // pred_check_branch
          %1100 = sbr.rel (%p1098) target = $region56
        $region55: #{bottleneck_kagn_conv2d.1} parent=51 // pred_region
          %p1101 = scmp.lt.s32.totalorder %s23, 0
          %s1102 = scalar_select %p1101, %s23, 0
          %p1103 = scmp.lt.s32.totalorder %s24, 1
          %s1104 = scalar_select %p1103, %s24, 1
          %s1105 = smul.addr %s1104, 3
          %s1106 = smul.addr %s1102, 6
          %s1107 = sadd.s32 %s1105, %s1106
          %s1108 = smul.addr %s1107, 8
          %s1109 = scalar_lea.vmem %s5, %s1108
        $region56: #{bottleneck_kagn_conv2d.1} parent=51 // pred_fallthru
          _
      $region52: #{bottleneck_kagn_conv2d.1} parent=5 // pred_fallthru
        _
    $region6: #{bottleneck_kagn_conv2d.1} parent=1 // loop_footer
      %s16 = sadd.s32 1, %s12
    $region7: #{bottleneck_kagn_conv2d.1} parent=1 // loop_footer_branch
      %11 = sbr.rel target = $region3
    $region8: #{bottleneck_kagn_conv2d.1} parent=1 // loop_exit
      _
    %1110 = vsyncpa [#allocation3], 1
    %s1111 = scalar_lea.sflag [#allocation3], 1
    %1112 = vsyncpa %s1111, 1

</llo_original>
